<compile_context>
chip_gen: v7x
topology: tpu7x:2x2x1
jax: 0.10.0
libtpu: 0.0.40
codegen_flags: <defaults>
</compile_context>

<pallas_src>
import functools

import numpy as np
import jax
import jax.numpy as jnp
from jax.experimental import pallas as pl
from jax.experimental.pallas import tpu as pltpu

LOG_2PI = float(np.log(2.0 * np.pi))


def _const_cols(values, shape):
    """Build a (rows, len(values)) f32 array of per-column constants from Python
    floats using only splat constants + iota (cheap and always lowerable)."""
    col = jax.lax.broadcasted_iota(jnp.int32, shape, 1)
    out = jnp.full(shape, float(values[0]), dtype=jnp.float32)
    for i in range(1, len(values)):
        out = jnp.where(col == i, jnp.float32(float(values[i])), out)
    return out


def actor_kernel(state_ref, w1_ref, b1_ref, w2_ref, w3_ref, b23_ref, eps_ref,
                 action_ref, logp_ref, acc_ref,
                 *, hidden, action_dim, scale, shift, act_range):
    k = pl.program_id(0)

    @pl.when(k == 0)
    def _init():
        acc_ref[...] = jnp.zeros_like(acc_ref)

    # ---- layer 1, column chunk k: relu(state @ w1[:, k*TK:(k+1)*TK] + b1_chunk)
    h1 = jnp.dot(state_ref[...].astype(jnp.bfloat16), w1_ref[...],
                 preferred_element_type=jnp.float32)
    h1 = jnp.maximum(h1 + b1_ref[...], 0.0)

    # ---- layer 2 partial product over the hidden (K) axis, f32 accumulation
    acc_ref[...] += jnp.dot(h1.astype(jnp.bfloat16), w2_ref[...],
                            preferred_element_type=jnp.float32)

    # ---- epilogue on the last K chunk: head + sample + squash + log-prob
    @pl.when(k == pl.num_programs(0) - 1)
    def _finalize():
        h2 = jnp.maximum(acc_ref[...] + b23_ref[:, :hidden], 0.0)
        mean = jnp.tanh(
            jnp.dot(h2.astype(jnp.bfloat16), w3_ref[...],
                    preferred_element_type=jnp.float32)
            + b23_ref[:, hidden:])

        eps = eps_ref[...]                 # N(0,1) noise; std = exp(log_std=0) = 1
        x_t = mean + eps                   # rsample()
        y_t = jnp.tanh(x_t)

        shape = (eps.shape[0], action_dim)
        scale_v = _const_cols(scale, shape)       # (max - min) / 2
        shift_v = _const_cols(shift, shape)       # (max + min) / 2
        range_v = _const_cols(act_range, shape)   # (max - min)

        action_ref[...] = y_t * scale_v + shift_v

        # Normal(mean, 1).log_prob(x_t) = -0.5*eps^2 - 0.5*log(2*pi)
        logp = -0.5 * eps * eps - 0.5 * LOG_2PI
        logp = logp - jnp.log(range_v * (1.0 - y_t * y_t) + 1e-6)
        logp_ref[...] = jnp.sum(logp, axis=1, keepdims=True)


def actor_forward(state, params, eps, max_action, min_action, *, tk=128):
    B, state_dim = state.shape
    hidden = params["w2"].shape[0]
    action_dim = params["w3"].shape[1]
    assert hidden % tk == 0

    max_a = np.asarray(max_action, dtype=np.float32).reshape(action_dim)
    min_a = np.asarray(min_action, dtype=np.float32).reshape(action_dim)
    scale = tuple(float(v) for v in (max_a - min_a) / 2.0)
    shift = tuple(float(v) for v in (max_a + min_a) / 2.0)
    act_range = tuple(float(v) for v in (max_a - min_a))

    kernel = functools.partial(
        actor_kernel, hidden=hidden, action_dim=action_dim,
        scale=scale, shift=shift, act_range=act_range)

    # Advisory cost estimate so XLA can overlap this tiny custom call.
    flops = 2 * B * (state_dim * hidden + hidden * hidden + hidden * action_dim)
    bytes_accessed = (2 * (state_dim * hidden + hidden * hidden + hidden * action_dim)  # bf16 weights
                      + 4 * (2 * hidden + action_dim)                                   # f32 biases
                      + 4 * B * (state_dim + 2 * action_dim + 1))                       # state/eps/outs
    cost = pl.CostEstimate(flops=flops, transcendentals=3 * B * action_dim,
                           bytes_accessed=bytes_accessed)

    out_shapes = (
        jax.ShapeDtypeStruct((B, action_dim), jnp.float32),   # action
        jax.ShapeDtypeStruct((B, 1), jnp.float32),            # log_prob
    )

    # TODO(synk): generate eps in-kernel (pltpu.prng_seed + stateful_normal) to drop
    # the host-side jax.random.normal call; kept as an input here for deterministic,
    # torch-rsample-equivalent noise and guaranteed lowering.
    return pl.pallas_call(
        kernel,
        out_shape=out_shapes,
        grid_spec=pltpu.PrefetchScalarGridSpec(
            num_scalar_prefetch=0,
            grid=(hidden // tk,),                                     # K chunks of layer 1/2
            in_specs=[
                pl.BlockSpec((B, state_dim), lambda k: (0, 0)),       # state (loaded once)
                pl.BlockSpec((state_dim, tk), lambda k: (0, k)),      # w1 column chunk
                pl.BlockSpec((1, tk), lambda k: (0, k)),              # b1 chunk
                pl.BlockSpec((tk, hidden), lambda k: (k, 0)),         # w2 row chunk
                pl.BlockSpec((hidden, action_dim), lambda k: (0, 0)), # w3 (loaded once)
                pl.BlockSpec((1, hidden + action_dim), lambda k: (0, 0)),  # packed b2|b3
                pl.BlockSpec((B, action_dim), lambda k: (0, 0)),      # eps
            ],
            out_specs=(
                pl.BlockSpec((B, action_dim), lambda k: (0, 0)),
                pl.BlockSpec((B, 1), lambda k: (0, 0)),
            ),
            scratch_shapes=[pltpu.VMEM((B, hidden), jnp.float32)],    # layer-2 accumulator
        ),
        compiler_params=pltpu.CompilerParams(
            dimension_semantics=("arbitrary",)),                      # K is a reduction axis
        cost_estimate=cost,
    )(state, params["w1"], params["b1"], params["w2"], params["w3"],
      params["b23"], eps)


def init_params(key, state_dim, hidden, action_dim):
    """nn.Linear-style init. Weights stored (in, out) and cast to bf16 for the
    bandwidth-bound MXU path; biases stay f32 (added after f32 accumulation)."""
    def linear(key, fan_in, fan_out):
        kw, kb = jax.random.split(key)
        bound = 1.0 / np.sqrt(fan_in)
        w = jax.random.uniform(kw, (fan_in, fan_out), jnp.float32, -bound, bound)
        b = jax.random.uniform(kb, (1, fan_out), jnp.float32, -bound, bound)
        return w.astype(jnp.bfloat16), b

    k1, k2, k3 = jax.random.split(key, 3)
    w1, b1 = linear(k1, state_dim, hidden)
    w2, b2 = linear(k2, hidden, hidden)
    w3, b3 = linear(k3, hidden, action_dim)
    b23 = jnp.concatenate([b2, b3], axis=1)       # single packed bias for l2/l3
    return {"w1": w1, "b1": b1, "w2": w2, "w3": w3, "b23": b23}


def actor_reference(state, params, eps, max_action, min_action):
    """Pure-JAX reference with matched bf16-matmul / f32-elementwise numerics."""
    hidden = params["w2"].shape[0]
    b2 = params["b23"][:, :hidden]
    b3 = params["b23"][:, hidden:]
    scale = (max_action - min_action) / 2.0
    shift = (max_action + min_action) / 2.0
    rng = (max_action - min_action)

    h = jnp.maximum(jnp.dot(state.astype(jnp.bfloat16), params["w1"],
                            preferred_element_type=jnp.float32) + params["b1"], 0.0)
    h = jnp.maximum(jnp.dot(h.astype(jnp.bfloat16), params["w2"],
                            preferred_element_type=jnp.float32) + b2, 0.0)
    mean = jnp.tanh(jnp.dot(h.astype(jnp.bfloat16), params["w3"],
                            preferred_element_type=jnp.float32) + b3)
    x_t = mean + eps
    y_t = jnp.tanh(x_t)
    action = y_t * scale + shift
    logp = -0.5 * eps * eps - 0.5 * LOG_2PI
    logp = logp - jnp.log(rng * (1.0 - y_t * y_t) + 1e-6)
    return action, jnp.sum(logp, axis=1, keepdims=True)


if __name__ == "__main__":
    # Small shapes consistent with the module (hidden=512 is fixed by the Actor).
    batch = 8
    state_dim = 16
    hidden = 512
    action_dim = 2

    # Action bounds (linear velocity, angular velocity) like a turtlebot env.
    max_action = np.array([0.22, 2.84], dtype=np.float32)
    min_action = np.array([-0.22, -2.84], dtype=np.float32)

    key = jax.random.PRNGKey(0)
    k_params, k_state, k_eps = jax.random.split(key, 3)

    params = init_params(k_params, state_dim, hidden, action_dim)
    state = jax.random.normal(k_state, (batch, state_dim), dtype=jnp.float32)
    # reparameterization noise eps ~ N(0, 1) (std = exp(0) = 1)
    eps = jax.random.normal(k_eps, (batch, action_dim), dtype=jnp.float32)

    action, log_prob = actor_forward(state, params, eps, max_action, min_action)
    jax.block_until_ready((action, log_prob))

    ref_action, ref_logp = actor_reference(state, params, eps, max_action, min_action)

    assert action.shape == (batch, action_dim)
    assert log_prob.shape == (batch, 1)
    assert bool(jnp.all(jnp.isfinite(action)))
    assert bool(jnp.all(jnp.isfinite(log_prob)))
    assert bool(jnp.allclose(action, ref_action, atol=5e-2, rtol=5e-2))
    assert bool(jnp.allclose(log_prob, ref_logp, atol=5e-2, rtol=5e-2))

    print("KERNEL_OK")
</pallas_src>

<mosaic_0001>
module attributes {stable_mosaic.version = 11 : i64} {
  func.func @actor_kernel(%arg0: i32, %arg1: memref<8x16xf32, #tpu.memory_space<vmem>>, %arg2: memref<16x128xbf16, #tpu.memory_space<vmem>>, %arg3: memref<1x128xf32, #tpu.memory_space<vmem>>, %arg4: memref<128x512xbf16, #tpu.memory_space<vmem>>, %arg5: memref<512x2xbf16, #tpu.memory_space<vmem>>, %arg6: memref<1x514xf32, #tpu.memory_space<vmem>>, %arg7: memref<8x2xf32, #tpu.memory_space<vmem>>, %arg8: memref<8x2xf32, #tpu.memory_space<vmem>>, %arg9: memref<8x1xf32, #tpu.memory_space<vmem>>, %arg10: memref<8x512xf32, #tpu.memory_space<vmem>>) attributes {dimension_semantics = [#tpu.dimension_semantics<arbitrary>], iteration_bounds = array<i64: 4>, scalar_prefetch = 0 : i64, scratch_operands = 1 : i64, tpu.core_type = #tpu.core_type<tc>, window_params = [{pipeline_mode = #tpu.pipeline_mode<synchronous>, transform_indices = @transform_0, window_bounds = array<i64: 8, 16>}, {transform_indices = @transform_1, window_bounds = array<i64: 16, 128>}, {transform_indices = @transform_2, window_bounds = array<i64: 1, 128>}, {transform_indices = @transform_3, window_bounds = array<i64: 128, 512>}, {pipeline_mode = #tpu.pipeline_mode<synchronous>, transform_indices = @transform_4, window_bounds = array<i64: 512, 2>}, {pipeline_mode = #tpu.pipeline_mode<synchronous>, transform_indices = @transform_5, window_bounds = array<i64: 1, 514>}, {pipeline_mode = #tpu.pipeline_mode<synchronous>, transform_indices = @transform_6, window_bounds = array<i64: 8, 2>}, {pipeline_mode = #tpu.pipeline_mode<synchronous>, transform_indices = @transform_7, window_bounds = array<i64: 8, 2>}, {pipeline_mode = #tpu.pipeline_mode<synchronous>, transform_indices = @transform_8, window_bounds = array<i64: 8, 1>}]} {
    %c0_i32 = arith.constant 0 : i32
    %0 = arith.cmpi eq, %arg0, %c0_i32 : i32
    %1 = arith.extui %0 : i1 to i32
    %c0_i32_0 = arith.constant 0 : i32
    %2 = arith.cmpi ne, %1, %c0_i32_0 : i32
    scf.if %2 {
      %cst_15 = arith.constant 0.000000e+00 : f32
      %21 = vector.broadcast %cst_15 : f32 to vector<8x512xf32>
      %c0_16 = arith.constant 0 : index
      %c0_17 = arith.constant 0 : index
      %22 = vector.load %arg10[%c0_16, %c0_17] : memref<8x512xf32, #tpu.memory_space<vmem>>, vector<8x512xf32>
      tpu.vector_store %arg10[%c0_16, %c0_17], %21 {strides = array<i32>} : memref<8x512xf32, #tpu.memory_space<vmem>>, vector<8x512xf32>,
    } else {
    }
    %c0 = arith.constant 0 : index
    %c0_1 = arith.constant 0 : index
    %3 = vector.load %arg1[%c0, %c0_1] : memref<8x16xf32, #tpu.memory_space<vmem>>, vector<8x16xf32>
    %4 = arith.truncf %3 : vector<8x16xf32> to vector<8x16xbf16>
    %c0_2 = arith.constant 0 : index
    %c0_3 = arith.constant 0 : index
    %5 = vector.load %arg2[%c0_2, %c0_3] : memref<16x128xbf16, #tpu.memory_space<vmem>>, vector<16x128xbf16>
    %cst = arith.constant dense<0.000000e+00> : vector<8x128xf32>
    %6 = tpu.matmul %4, %5, %cst {dimension_numbers = #tpu.dot_dimension_numbers<[1], [0], [0], [1], [0, 0, 1, 1], [], []>} : vector<8x16xbf16>, vector<16x128xbf16>, vector<8x128xf32> -> vector<8x128xf32>
    %c0_4 = arith.constant 0 : index
    %c0_5 = arith.constant 0 : index
    %7 = vector.load %arg3[%c0_4, %c0_5] : memref<1x128xf32, #tpu.memory_space<vmem>>, vector<1x128xf32>
    %8 = vector.broadcast %7 : vector<1x128xf32> to vector<8x128xf32>
    %9 = arith.addf %6, %8 : vector<8x128xf32>
    %cst_6 = arith.constant 0.000000e+00 : f32
    %10 = vector.broadcast %cst_6 : f32 to vector<8x128xf32>
    %11 = arith.maximumf %9, %10 : vector<8x128xf32>
    %c0_7 = arith.constant 0 : index
    %c0_8 = arith.constant 0 : index
    %12 = vector.load %arg10[%c0_7, %c0_8] : memref<8x512xf32, #tpu.memory_space<vmem>>, vector<8x512xf32>
    %13 = arith.truncf %11 : vector<8x128xf32> to vector<8x128xbf16>
    %c0_9 = arith.constant 0 : index
    %c0_10 = arith.constant 0 : index
    %14 = vector.load %arg4[%c0_9, %c0_10] : memref<128x512xbf16, #tpu.memory_space<vmem>>, vector<128x512xbf16>
    %cst_11 = arith.constant dense<0.000000e+00> : vector<8x512xf32>
    %15 = tpu.matmul %13, %14, %cst_11 {dimension_numbers = #tpu.dot_dimension_numbers<[1], [0], [0], [1], [0, 0, 1, 1], [], []>} : vector<8x128xbf16>, vector<128x512xbf16>, vector<8x512xf32> -> vector<8x512xf32>
    %16 = arith.addf %12, %15 : vector<8x512xf32>
    %c0_12 = arith.constant 0 : index
    %c0_13 = arith.constant 0 : index
    %17 = vector.load %arg10[%c0_12, %c0_13] : memref<8x512xf32, #tpu.memory_space<vmem>>, vector<8x512xf32>
    tpu.vector_store %arg10[%c0_12, %c0_13], %16 {strides = array<i32>} : memref<8x512xf32, #tpu.memory_space<vmem>>, vector<8x512xf32>,
    %c3_i32 = arith.constant 3 : i32
    %18 = arith.cmpi eq, %arg0, %c3_i32 : i32
    %19 = arith.extui %18 : i1 to i32
    %c0_i32_14 = arith.constant 0 : i32
    %20 = arith.cmpi ne, %19, %c0_i32_14 : i32
    scf.if %20 {
      %c0_15 = arith.constant 0 : index
      %c0_16 = arith.constant 0 : index
      %21 = vector.load %arg10[%c0_15, %c0_16] : memref<8x512xf32, #tpu.memory_space<vmem>>, vector<8x512xf32>
      %c0_17 = arith.constant 0 : index
      %c0_18 = arith.constant 0 : index
      %22 = vector.load %arg6[%c0_17, %c0_18] : memref<1x514xf32, #tpu.memory_space<vmem>>, vector<1x512xf32>
      %23 = vector.broadcast %22 : vector<1x512xf32> to vector<8x512xf32>
      %24 = arith.addf %21, %23 : vector<8x512xf32>
      %cst_19 = arith.constant 0.000000e+00 : f32
      %25 = vector.broadcast %cst_19 : f32 to vector<8x512xf32>
      %26 = arith.maximumf %24, %25 : vector<8x512xf32>
      %27 = arith.truncf %26 : vector<8x512xf32> to vector<8x512xbf16>
      %c0_20 = arith.constant 0 : index
      %c0_21 = arith.constant 0 : index
      %28 = vector.load %arg5[%c0_20, %c0_21] : memref<512x2xbf16, #tpu.memory_space<vmem>>, vector<512x2xbf16>
      %cst_22 = arith.constant dense<0.000000e+00> : vector<8x2xf32>
      %29 = tpu.matmul %27, %28, %cst_22 {dimension_numbers = #tpu.dot_dimension_numbers<[1], [0], [0], [1], [0, 0, 1, 1], [], []>} : vector<8x512xbf16>, vector<512x2xbf16>, vector<8x2xf32> -> vector<8x2xf32>
      %c0_23 = arith.constant 0 : index
      %c512 = arith.constant 512 : index
      %30 = vector.load %arg6[%c0_23, %c512] : memref<1x514xf32, #tpu.memory_space<vmem>>, vector<1x2xf32>
      %31 = vector.broadcast %30 : vector<1x2xf32> to vector<8x2xf32>
      %32 = arith.addf %29, %31 : vector<8x2xf32>
      %33 = math.tanh %32 : vector<8x2xf32>
      %c0_24 = arith.constant 0 : index
      %c0_25 = arith.constant 0 : index
      %34 = vector.load %arg7[%c0_24, %c0_25] : memref<8x2xf32, #tpu.memory_space<vmem>>, vector<8x2xf32>
      %35 = arith.addf %33, %34 : vector<8x2xf32>
      %36 = math.tanh %35 : vector<8x2xf32>
      %37 = tpu.iota {dimensions = array<i32: 1>} : vector<8x2xi32>
      %cst_26 = arith.constant 2.200000e-01 : f32
      %38 = vector.broadcast %cst_26 : f32 to vector<8x2xf32>
      %c1_i32 = arith.constant 1 : i32
      %39 = vector.broadcast %c1_i32 : i32 to vector<8x2xi32>
      %40 = arith.cmpi eq, %37, %39 : vector<8x2xi32>
      %cst_27 = arith.constant 2.840000e+00 : f32
      %41 = vector.broadcast %cst_27 : f32 to vector<8x2xf32>
      %42 = arith.select %40, %41, %38 : vector<8x2xi1>, vector<8x2xf32>
      %43 = tpu.iota {dimensions = array<i32: 1>} : vector<8x2xi32>
      %cst_28 = arith.constant 0.000000e+00 : f32
      %44 = vector.broadcast %cst_28 : f32 to vector<8x2xf32>
      %c1_i32_29 = arith.constant 1 : i32
      %45 = vector.broadcast %c1_i32_29 : i32 to vector<8x2xi32>
      %46 = arith.cmpi eq, %43, %45 : vector<8x2xi32>
      %cst_30 = arith.constant 0.000000e+00 : f32
      %47 = vector.broadcast %cst_30 : f32 to vector<8x2xf32>
      %48 = arith.select %46, %47, %44 : vector<8x2xi1>, vector<8x2xf32>
      %49 = tpu.iota {dimensions = array<i32: 1>} : vector<8x2xi32>
      %cst_31 = arith.constant 4.400000e-01 : f32
      %50 = vector.broadcast %cst_31 : f32 to vector<8x2xf32>
      %c1_i32_32 = arith.constant 1 : i32
      %51 = vector.broadcast %c1_i32_32 : i32 to vector<8x2xi32>
      %52 = arith.cmpi eq, %49, %51 : vector<8x2xi32>
      %cst_33 = arith.constant 5.680000e+00 : f32
      %53 = vector.broadcast %cst_33 : f32 to vector<8x2xf32>
      %54 = arith.select %52, %53, %50 : vector<8x2xi1>, vector<8x2xf32>
      %55 = arith.mulf %36, %42 : vector<8x2xf32>
      %56 = arith.addf %55, %48 : vector<8x2xf32>
      %c0_34 = arith.constant 0 : index
      %c0_35 = arith.constant 0 : index
      %57 = vector.load %arg8[%c0_34, %c0_35] : memref<8x2xf32, #tpu.memory_space<vmem>>, vector<8x2xf32>
      tpu.vector_store %arg8[%c0_34, %c0_35], %56 {strides = array<i32>} : memref<8x2xf32, #tpu.memory_space<vmem>>, vector<8x2xf32>,
      %cst_36 = arith.constant -5.000000e-01 : f32
      %58 = vector.broadcast %cst_36 : f32 to vector<8x2xf32>
      %59 = arith.mulf %58, %34 : vector<8x2xf32>
      %60 = arith.mulf %59, %34 : vector<8x2xf32>
      %cst_37 = arith.constant 0.918938517 : f32
      %61 = vector.broadcast %cst_37 : f32 to vector<8x2xf32>
      %62 = arith.subf %60, %61 : vector<8x2xf32>
      %63 = arith.mulf %36, %36 : vector<8x2xf32>
      %cst_38 = arith.constant 1.000000e+00 : f32
      %64 = vector.broadcast %cst_38 : f32 to vector<8x2xf32>
      %65 = arith.subf %64, %63 : vector<8x2xf32>
      %66 = arith.mulf %54, %65 : vector<8x2xf32>
      %cst_39 = arith.constant 9.99999997E-7 : f32
      %67 = vector.broadcast %cst_39 : f32 to vector<8x2xf32>
      %68 = arith.addf %66, %67 : vector<8x2xf32>
      %69 = math.log %68 : vector<8x2xf32>
      %70 = arith.subf %62, %69 : vector<8x2xf32>
      %cst_40 = arith.constant dense<0.000000e+00> : vector<8xf32>
      %71 = vector.multi_reduction <add>, %70, %cst_40 [1] : vector<8x2xf32> to vector<8xf32>
      %72 = vector.shape_cast %71 : vector<8xf32> to vector<8x1xf32>
      %c0_41 = arith.constant 0 : index
      %c0_42 = arith.constant 0 : index
      %73 = vector.load %arg9[%c0_41, %c0_42] : memref<8x1xf32, #tpu.memory_space<vmem>>, vector<8x1xf32>
      tpu.vector_store %arg9[%c0_41, %c0_42], %72 {strides = array<i32>} : memref<8x1xf32, #tpu.memory_space<vmem>>, vector<8x1xf32>,
    } else {
    }
    return
  }
  func.func @transform_0(%arg0: i32) -> (i32, i32) {
    %c0_i32 = arith.constant 0 : i32
    %c0_i32_0 = arith.constant 0 : i32
    %c0_i32_1 = arith.constant 0 : i32
    return %c0_i32, %c0_i32_0 : i32, i32
  }
  func.func @transform_1(%arg0: i32) -> (i32, i32) {
    %c0_i32 = arith.constant 0 : i32
    %c0_i32_0 = arith.constant 0 : i32
    return %c0_i32, %arg0 : i32, i32
  }
  func.func @transform_2(%arg0: i32) -> (i32, i32) {
    %c0_i32 = arith.constant 0 : i32
    %c0_i32_0 = arith.constant 0 : i32
    return %c0_i32, %arg0 : i32, i32
  }
  func.func @transform_3(%arg0: i32) -> (i32, i32) {
    %c0_i32 = arith.constant 0 : i32
    %c0_i32_0 = arith.constant 0 : i32
    return %arg0, %c0_i32 : i32, i32
  }
  func.func @transform_4(%arg0: i32) -> (i32, i32) {
    %c0_i32 = arith.constant 0 : i32
    %c0_i32_0 = arith.constant 0 : i32
    %c0_i32_1 = arith.constant 0 : i32
    return %c0_i32, %c0_i32_0 : i32, i32
  }
  func.func @transform_5(%arg0: i32) -> (i32, i32) {
    %c0_i32 = arith.constant 0 : i32
    %c0_i32_0 = arith.constant 0 : i32
    %c0_i32_1 = arith.constant 0 : i32
    return %c0_i32, %c0_i32_0 : i32, i32
  }
  func.func @transform_6(%arg0: i32) -> (i32, i32) {
    %c0_i32 = arith.constant 0 : i32
    %c0_i32_0 = arith.constant 0 : i32
    %c0_i32_1 = arith.constant 0 : i32
    return %c0_i32, %c0_i32_0 : i32, i32
  }
  func.func @transform_7(%arg0: i32) -> (i32, i32) {
    %c0_i32 = arith.constant 0 : i32
    %c0_i32_0 = arith.constant 0 : i32
    %c0_i32_1 = arith.constant 0 : i32
    return %c0_i32, %c0_i32_0 : i32, i32
  }
  func.func @transform_8(%arg0: i32) -> (i32, i32) {
    %c0_i32 = arith.constant 0 : i32
    %c0_i32_0 = arith.constant 0 : i32
    %c0_i32_1 = arith.constant 0 : i32
    return %c0_i32, %c0_i32_0 : i32, i32
  }
}

</mosaic_0001>

<llo_original>
// kernel: tpu_custom_call.1
$region0: #{tpu_custom_call.1}
  #allocation0 [shape = 'u32[]', space=smem, size = 0x4, offset = 0x4, fixed_abs, tag = 'smem constant byte address 0x4 - core index']
  #allocation1 [shape = 'u32[144,128]{1,0:T(1,128)}', space=vmem, size = 0x12000, scoped, tag = 'internal scratch']
  #allocation2 [shape = 'f32[8,512]{1,0:T(8,128)}', space=vmem, size = 0x4000, scoped, tag = 'scratch operand']
  %s0 = inlined_call_operand.vmem [shape: f32[8,16], index: 0, kind: input, shape index: {}]
  %s1 = inlined_call_operand.vmem [shape: bf16[16,512], index: 1, kind: input, shape index: {}]
  %s2 = inlined_call_operand.vmem [shape: f32[1,512], index: 2, kind: input, shape index: {}]
  %s3 = inlined_call_operand.hbm [shape: bf16[512,512], index: 3, kind: input, shape index: {}]
  %s4 = inlined_call_operand.vmem [shape: bf16[512,2], index: 4, kind: input, shape index: {}]
  %s5 = inlined_call_operand.vmem [shape: f32[1,514], index: 5, kind: input, shape index: {}]
  %s6 = inlined_call_operand.vmem [shape: f32[8,2], index: 6, kind: input, shape index: {}]
  %s7 = inlined_call_operand.vmem [shape: f32[8,2], index: 7, kind: output, shape index: {0}]
  %s8 = inlined_call_operand.vmem [shape: f32[8,1], index: 8, kind: output, shape index: {1}]
  %9 = xla_tuple %s7, %s8
  %s10 = sld [smem:[#allocation0]]
  $region122: #{tpu_custom_call.1} parent=0
    _
  %s12 = ssub.s32 1, %s10
  %s13 = scalar_select 0, %s12, %s10
  $region1: #{tpu_custom_call.1} parent=0
    #allocation3 [shape = 'u8[8192]{0}', space=vmem, size = 0x2000, scoped, tag = 'input window, operand 1']
    #allocation4 [shape = 'u8[262144]{0}', space=vmem, size = 0x40000, scoped, tag = 'input window, operand 3']
    #allocation5 [shape = 's32[2]{0}', space=sflag, size = 0x8, scoped, tag = 'scoped memory for tpu_custom_call.1']
    %14 = vsyncpa [#allocation5], 0
    %s15 = scalar_lea.sflag [#allocation5], 1
    %16 = vsyncpa %s15, 0
    loop: start=0, step=1, limit=6
    $region2: #{tpu_custom_call.1} parent=1 // loop_pre_header
      _
    $region3: #{tpu_custom_call.1} parent=1 // loop_header
      %s18 = sphi 0, %s22
      %p19 = scmp.ge.s32.totalorder %s18, 6
      %s26 = sphi 0, %s26
      %s28 = sphi 0, %s26
      %s29 = sphi 0, %s28
      %s43 = sphi 0, %s29
      %s49 = sphi 0, %s51
      %s52 = sphi 0, %s49
      %s53 = sphi 0, %s52
      %s69 = sphi 0, %s53
      %s75 = sphi 0, %s77
      %s78 = sphi 0, %s75
      %s79 = sphi 0, %s78
      %s95 = sphi 0, %s79
      %s101 = sphi 0, %s103
      %s104 = sphi 0, %s101
      %s105 = sphi 0, %s104
      %s121 = sphi 0, %s105
      %s125 = sphi 0, %s125
      %s127 = sphi 0, %s125
      %s128 = sphi 0, %s127
      %s142 = sphi 0, %s128
      %s146 = sphi 0, %s146
      %s148 = sphi 0, %s146
      %s149 = sphi 0, %s148
      %s163 = sphi 0, %s149
      %s167 = sphi 0, %s167
      %s169 = sphi 0, %s167
      %s170 = sphi 0, %s169
      %s184 = sphi 0, %s170
      %s188 = sphi 0, %s188
      %s190 = sphi 0, %s188
      %s191 = sphi 0, %s190
      %s205 = sphi 0, %s191
      %s209 = sphi 0, %s209
      %s211 = sphi 0, %s209
      %s212 = sphi 0, %s211
      %s226 = sphi 0, %s212
    $region4: #{tpu_custom_call.1} parent=1 // loop_header_branch
      %21 = sbr.rel (%p19) target = $region8
    $region5: #{tpu_custom_call.1} parent=1 // loop_body
      %s23 = ssub.s32 %s18, 1
      %s24 = ssub.s32 %s18, 2
      %s25 = sadd.s32 %s18, 1
      %s27 = sadd.s32 %s26, 1
      %p30 = scmp.eq.s32.totalorder %s18, 3
      %p31 = scmp.ne.s32.totalorder %s26, %s28
      %p32 = scmp.eq.s32.totalorder %s18, 0
      %p33 = por %p31, %p32
      %p34 = scmp.ne.s32.totalorder %s26, %s28
      %p35 = scmp.eq.s32.totalorder %s23, 3
      %p36 = por %p34, %p35
      %p37 = scmp.ne.s32.totalorder %s28, %s29
      %p38 = scmp.eq.s32.totalorder %s23, 0
      %p39 = por %p37, %p38
      %p40 = scmp.ne.s32.totalorder %s28, %s29
      %p41 = scmp.eq.s32.totalorder %s24, 3
      %p42 = por %p40, %p41
      %p44 = scmp.ne.s32.totalorder %s29, %s43
      %p45 = scmp.eq.s32.totalorder %s24, 0
      %p46 = por %p44, %p45
      %s47 = ssub.s32 %s18, %s25
      %p48 = scmp.eq.s32.totalorder %s47, 0
      %s50 = sadd.s32 %s49, 1
      %s51 = scalar_select %p48, %s49, %s50
      %p54 = pneg %p48
      %p55 = scmp.eq.s32.totalorder %s18, 3
      %p56 = por %p54, %p55
      %p57 = scmp.ne.s32.totalorder %s49, %s52
      %p58 = scmp.eq.s32.totalorder %s18, 0
      %p59 = por %p57, %p58
      %p60 = scmp.ne.s32.totalorder %s49, %s52
      %p61 = scmp.eq.s32.totalorder %s23, 3
      %p62 = por %p60, %p61
      %p63 = scmp.ne.s32.totalorder %s52, %s53
      %p64 = scmp.eq.s32.totalorder %s23, 0
      %p65 = por %p63, %p64
      %p66 = scmp.ne.s32.totalorder %s52, %s53
      %p67 = scmp.eq.s32.totalorder %s24, 3
      %p68 = por %p66, %p67
      %p70 = scmp.ne.s32.totalorder %s53, %s69
      %p71 = scmp.eq.s32.totalorder %s24, 0
      %p72 = por %p70, %p71
      %s73 = ssub.s32 %s18, %s25
      %p74 = scmp.eq.s32.totalorder %s73, 0
      %s76 = sadd.s32 %s75, 1
      %s77 = scalar_select %p74, %s75, %s76
      %p80 = pneg %p74
      %p81 = scmp.eq.s32.totalorder %s18, 3
      %p82 = por %p80, %p81
      %p83 = scmp.ne.s32.totalorder %s75, %s78
      %p84 = scmp.eq.s32.totalorder %s18, 0
      %p85 = por %p83, %p84
      %p86 = scmp.ne.s32.totalorder %s75, %s78
      %p87 = scmp.eq.s32.totalorder %s23, 3
      %p88 = por %p86, %p87
      %p89 = scmp.ne.s32.totalorder %s78, %s79
      %p90 = scmp.eq.s32.totalorder %s23, 0
      %p91 = por %p89, %p90
      %p92 = scmp.ne.s32.totalorder %s78, %s79
      %p93 = scmp.eq.s32.totalorder %s24, 3
      %p94 = por %p92, %p93
      %p96 = scmp.ne.s32.totalorder %s79, %s95
      %p97 = scmp.eq.s32.totalorder %s24, 0
      %p98 = por %p96, %p97
      %s99 = ssub.s32 %s18, %s25
      %p100 = scmp.eq.s32.totalorder %s99, 0
      %s102 = sadd.s32 %s101, 1
      %s103 = scalar_select %p100, %s101, %s102
      %p106 = pneg %p100
      %p107 = scmp.eq.s32.totalorder %s18, 3
      %p108 = por %p106, %p107
      %p109 = scmp.ne.s32.totalorder %s101, %s104
      %p110 = scmp.eq.s32.totalorder %s18, 0
      %p111 = por %p109, %p110
      %p112 = scmp.ne.s32.totalorder %s101, %s104
      %p113 = scmp.eq.s32.totalorder %s23, 3
      %p114 = por %p112, %p113
      %p115 = scmp.ne.s32.totalorder %s104, %s105
      %p116 = scmp.eq.s32.totalorder %s23, 0
      %p117 = por %p115, %p116
      %p118 = scmp.ne.s32.totalorder %s104, %s105
      %p119 = scmp.eq.s32.totalorder %s24, 3
      %p120 = por %p118, %p119
      %p122 = scmp.ne.s32.totalorder %s105, %s121
      %p123 = scmp.eq.s32.totalorder %s24, 0
      %p124 = por %p122, %p123
      %s126 = sadd.s32 %s125, 1
      %p129 = scmp.eq.s32.totalorder %s18, 3
      %p130 = scmp.ne.s32.totalorder %s125, %s127
      %p131 = scmp.eq.s32.totalorder %s18, 0
      %p132 = por %p130, %p131
      %p133 = scmp.ne.s32.totalorder %s125, %s127
      %p134 = scmp.eq.s32.totalorder %s23, 3
      %p135 = por %p133, %p134
      %p136 = scmp.ne.s32.totalorder %s127, %s128
      %p137 = scmp.eq.s32.totalorder %s23, 0
      %p138 = por %p136, %p137
      %p139 = scmp.ne.s32.totalorder %s127, %s128
      %p140 = scmp.eq.s32.totalorder %s24, 3
      %p141 = por %p139, %p140
      %p143 = scmp.ne.s32.totalorder %s128, %s142
      %p144 = scmp.eq.s32.totalorder %s24, 0
      %p145 = por %p143, %p144
      %s147 = sadd.s32 %s146, 1
      %p150 = scmp.eq.s32.totalorder %s18, 3
      %p151 = scmp.ne.s32.totalorder %s146, %s148
      %p152 = scmp.eq.s32.totalorder %s18, 0
      %p153 = por %p151, %p152
      %p154 = scmp.ne.s32.totalorder %s146, %s148
      %p155 = scmp.eq.s32.totalorder %s23, 3
      %p156 = por %p154, %p155
      %p157 = scmp.ne.s32.totalorder %s148, %s149
      %p158 = scmp.eq.s32.totalorder %s23, 0
      %p159 = por %p157, %p158
      %p160 = scmp.ne.s32.totalorder %s148, %s149
      %p161 = scmp.eq.s32.totalorder %s24, 3
      %p162 = por %p160, %p161
      %p164 = scmp.ne.s32.totalorder %s149, %s163
      %p165 = scmp.eq.s32.totalorder %s24, 0
      %p166 = por %p164, %p165
      %s168 = sadd.s32 %s167, 1
      %p171 = scmp.eq.s32.totalorder %s18, 3
      %p172 = scmp.ne.s32.totalorder %s167, %s169
      %p173 = scmp.eq.s32.totalorder %s18, 0
      %p174 = por %p172, %p173
      %p175 = scmp.ne.s32.totalorder %s167, %s169
      %p176 = scmp.eq.s32.totalorder %s23, 3
      %p177 = por %p175, %p176
      %p178 = scmp.ne.s32.totalorder %s169, %s170
      %p179 = scmp.eq.s32.totalorder %s23, 0
      %p180 = por %p178, %p179
      %p181 = scmp.ne.s32.totalorder %s169, %s170
      %p182 = scmp.eq.s32.totalorder %s24, 3
      %p183 = por %p181, %p182
      %p185 = scmp.ne.s32.totalorder %s170, %s184
      %p186 = scmp.eq.s32.totalorder %s24, 0
      %p187 = por %p185, %p186
      %s189 = sadd.s32 %s188, 1
      %p192 = scmp.eq.s32.totalorder %s18, 3
      %p193 = scmp.ne.s32.totalorder %s188, %s190
      %p194 = scmp.eq.s32.totalorder %s18, 0
      %p195 = por %p193, %p194
      %p196 = scmp.ne.s32.totalorder %s188, %s190
      %p197 = scmp.eq.s32.totalorder %s23, 3
      %p198 = por %p196, %p197
      %p199 = scmp.ne.s32.totalorder %s190, %s191
      %p200 = scmp.eq.s32.totalorder %s23, 0
      %p201 = por %p199, %p200
      %p202 = scmp.ne.s32.totalorder %s190, %s191
      %p203 = scmp.eq.s32.totalorder %s24, 3
      %p204 = por %p202, %p203
      %p206 = scmp.ne.s32.totalorder %s191, %s205
      %p207 = scmp.eq.s32.totalorder %s24, 0
      %p208 = por %p206, %p207
      %s210 = sadd.s32 %s209, 1
      %p213 = scmp.eq.s32.totalorder %s18, 3
      %p214 = scmp.ne.s32.totalorder %s209, %s211
      %p215 = scmp.eq.s32.totalorder %s18, 0
      %p216 = por %p214, %p215
      %p217 = scmp.ne.s32.totalorder %s209, %s211
      %p218 = scmp.eq.s32.totalorder %s23, 3
      %p219 = por %p217, %p218
      %p220 = scmp.ne.s32.totalorder %s211, %s212
      %p221 = scmp.eq.s32.totalorder %s23, 0
      %p222 = por %p220, %p221
      %p223 = scmp.ne.s32.totalorder %s211, %s212
      %p224 = scmp.eq.s32.totalorder %s24, 3
      %p225 = por %p223, %p224
      %p227 = scmp.ne.s32.totalorder %s212, %s226
      %p228 = scmp.eq.s32.totalorder %s24, 0
      %p229 = por %p227, %p228
      %p230 = scmp.le.s32.totalorder 1, %s18
      %p231 = scmp.lt.s32.totalorder %s18, 5
      %p232 = pnand %p230, %p231
      %p233 = pneg %p232
      // Predicated region
      $region9: #{tpu_custom_call.1} parent=5 // pred_check
        _
      $region10: #{tpu_custom_call.1} parent=5 // pred_check_branch
        %235 = sbr.rel (%p232) target = $region12
      $region11: #{tpu_custom_call.1} parent=5 // pred_region
        %s236 = ssub.s32 %s18, 1
        // Predicated region
        $region13: #{tpu_custom_call.1} parent=11 // pred_check
          %p237 = pneg %p39
        $region14: #{tpu_custom_call.1} parent=11 // pred_check_branch
          %239 = sbr.rel (%p237) target = $region16
        $region15: #{tpu_custom_call.1} parent=11 // pred_region
          _
        $region16: #{tpu_custom_call.1} parent=11 // pred_fallthru
          _
        // Predicated region
        $region17: #{tpu_custom_call.1} parent=11 // pred_check
          %p240 = pneg %p138
        $region18: #{tpu_custom_call.1} parent=11 // pred_check_branch
          %242 = sbr.rel (%p240) target = $region20
        $region19: #{tpu_custom_call.1} parent=11 // pred_region
          _
        $region20: #{tpu_custom_call.1} parent=11 // pred_fallthru
          _
        // Predicated region
        $region21: #{tpu_custom_call.1} parent=11 // pred_check
          %p243 = pneg %p159
        $region22: #{tpu_custom_call.1} parent=11 // pred_check_branch
          %245 = sbr.rel (%p243) target = $region24
        $region23: #{tpu_custom_call.1} parent=11 // pred_region
          _
        $region24: #{tpu_custom_call.1} parent=11 // pred_fallthru
          _
        // Predicated region
        $region25: #{tpu_custom_call.1} parent=11 // pred_check
          %p246 = pneg %p180
        $region26: #{tpu_custom_call.1} parent=11 // pred_check_branch
          %248 = sbr.rel (%p246) target = $region28
        $region27: #{tpu_custom_call.1} parent=11 // pred_region
          _
        $region28: #{tpu_custom_call.1} parent=11 // pred_fallthru
          _
      $region12: #{tpu_custom_call.1} parent=5 // pred_fallthru
        _
      %p249 = scmp.lt.s32.totalorder %s18, 4
      // Predicated region
      $region29: #{tpu_custom_call.1} parent=5 // pred_check
        %p250 = pneg %p249
      $region30: #{tpu_custom_call.1} parent=5 // pred_check_branch
        %252 = sbr.rel (%p250) target = $region32
      $region31: #{tpu_custom_call.1} parent=5 // pred_region
        // Predicated region
        $region33: #{tpu_custom_call.1} parent=31 // pred_check
          %p253 = pneg %p59
        $region34: #{tpu_custom_call.1} parent=31 // pred_check_branch
          %255 = sbr.rel (%p253) target = $region36
        $region35: #{tpu_custom_call.1} parent=31 // pred_region
          %s256 = sand.u32 %s49, 1
          %s257 = sand.u32 %s49, 1
          %s258 = smul.addr %s257, 8
          %s259 = scalar_lea.vmem [#allocation3], %s258
          %s260 = smul.addr %s18, 4
          %s261 = scalar_lea.vmem %s1, %s260
          // Predicated region
          $region37: #{tpu_custom_call.1} parent=35 // pred_check
            _
          $region38: #{tpu_custom_call.1} parent=35 // pred_check_branch
            %263 = sbr.rel (0) target = $region40
          $region39: #{tpu_custom_call.1} parent=35 // pred_region
            // Predicated region
            $region41: #{tpu_custom_call.1} parent=39 // pred_check
              _
            $region42: #{tpu_custom_call.1} parent=39 // pred_check_branch
              %265 = sbr.rel target = $region44
            $region43: #{tpu_custom_call.1} parent=39 // pred_region
              // Predicated region
              $region56: #{tpu_custom_call.1} parent=43 // pred_check
                _
              $region57: #{tpu_custom_call.1} parent=43 // pred_check_branch
                %282 = sbr.rel (0) target = $region59
              $region58: #{tpu_custom_call.1} parent=43 // pred_region
                loop: start=0, step=1, limit=1
                $region60: #{tpu_custom_call.1} parent=58 // loop_pre_header
                  _
                $region61: #{tpu_custom_call.1} parent=58 // loop_header
                  %s284 = sphi 0, %s288
                  %p285 = scmp.ge.s32.totalorder %s284, 1
                  %s289 = sphi %s261, %s261
                  %s290 = sphi %s259, %s259
                $region62: #{tpu_custom_call.1} parent=58 // loop_header_branch
                  %287 = sbr.rel (%p285) target = $region66
                $region63: #{tpu_custom_call.1} parent=58 // loop_body
                  _
                $region64: #{tpu_custom_call.1} parent=58 // loop_footer
                  %s288 = sadd.s32 1, %s284
                $region65: #{tpu_custom_call.1} parent=58 // loop_footer_branch
                  %283 = sbr.rel target = $region61
                $region66: #{tpu_custom_call.1} parent=58 // loop_exit
                  _
                loop: start=0, step=1, limit=1
                $region67: #{tpu_custom_call.1} parent=58 // loop_pre_header
                  _
                $region68: #{tpu_custom_call.1} parent=58 // loop_header
                  %s293 = sphi 0, %s297
                  %p294 = scmp.ge.s32.totalorder %s293, 1
                  %s298 = sphi %s261, %s261
                  %s299 = sphi %s259, %s259
                $region69: #{tpu_custom_call.1} parent=58 // loop_header_branch
                  %296 = sbr.rel (%p294) target = $region73
                $region70: #{tpu_custom_call.1} parent=58 // loop_body
                  %v300 = vld [vmem:[%s298] sm:$0xf]
                  %301 = vst [vmem:[%s299] sm:$0xf] %v300
                  %v302 = vld [vmem:[%s298 + $0x10] sm:$0xf]
                  %303 = vst [vmem:[%s299 + $0x4] sm:$0xf] %v302
                $region71: #{tpu_custom_call.1} parent=58 // loop_footer
                  %s297 = sadd.s32 1, %s293
                $region72: #{tpu_custom_call.1} parent=58 // loop_footer_branch
                  %292 = sbr.rel target = $region68
                $region73: #{tpu_custom_call.1} parent=58 // loop_exit
                  _
              $region59: #{tpu_custom_call.1} parent=43 // pred_fallthru
                _
            $region44: #{tpu_custom_call.1} parent=39 // pred_fallthru
              _
            // Predicated region
            $region45: #{tpu_custom_call.1} parent=39 // pred_check
              _
            $region46: #{tpu_custom_call.1} parent=39 // pred_check_branch
              %267 = sbr.rel (0) target = $region48
            $region47: #{tpu_custom_call.1} parent=39 // pred_region
              loop: start=0, step=1, limit=1
              $region49: #{tpu_custom_call.1} parent=47 // loop_pre_header
                _
              $region50: #{tpu_custom_call.1} parent=47 // loop_header
                %s270 = sphi 0, %s274
                %p271 = scmp.ge.s32.totalorder %s270, 1
                %s275 = sphi %s261, %s261
                %s276 = sphi %s259, %s259
              $region51: #{tpu_custom_call.1} parent=47 // loop_header_branch
                %273 = sbr.rel (%p271) target = $region55
              $region52: #{tpu_custom_call.1} parent=47 // loop_body
                %v277 = vld [vmem:[%s275] sm:$0xf]
                %278 = vst [vmem:[%s276] sm:$0xf] %v277
                %v279 = vld [vmem:[%s275 + $0x10] sm:$0xf]
                %280 = vst [vmem:[%s276 + $0x4] sm:$0xf] %v279
              $region53: #{tpu_custom_call.1} parent=47 // loop_footer
                %s274 = sadd.s32 1, %s270
              $region54: #{tpu_custom_call.1} parent=47 // loop_footer_branch
                %269 = sbr.rel target = $region50
              $region55: #{tpu_custom_call.1} parent=47 // loop_exit
                _
            $region48: #{tpu_custom_call.1} parent=39 // pred_fallthru
              _
          $region40: #{tpu_custom_call.1} parent=35 // pred_fallthru
            _
          %304 = vnop
        $region36: #{tpu_custom_call.1} parent=31 // pred_fallthru
          _
        // Predicated region
        $region74: #{tpu_custom_call.1} parent=31 // pred_check
          %p305 = pneg %p85
        $region75: #{tpu_custom_call.1} parent=31 // pred_check_branch
          %307 = sbr.rel (%p305) target = $region77
        $region76: #{tpu_custom_call.1} parent=31 // pred_region
          %p308 = scmp.lt.s32.totalorder %s18, 3
          %s309 = scalar_select %p308, %s18, 3
          %s310 = scalar_lea.vmem %s2, %s309
        $region77: #{tpu_custom_call.1} parent=31 // pred_fallthru
          _
        // Predicated region
        $region78: #{tpu_custom_call.1} parent=31 // pred_check
          %p311 = pneg %p111
        $region79: #{tpu_custom_call.1} parent=31 // pred_check_branch
          %313 = sbr.rel (%p311) target = $region81
        $region80: #{tpu_custom_call.1} parent=31 // pred_region
          %s314 = sand.u32 %s101, 1
          %s315 = scalar_lea.sflag [#allocation5], %s314
          %s316 = sand.u32 %s101, 1
          %s317 = smul.addr %s316, 256
          %s318 = scalar_lea.vmem [#allocation4], %s317
          %s319 = smul.u32 16, %s18
          %s321 = ssub.s32 4096, 4096
          %322 = vsyncadd %s315, %s321
          %s323 = smul.addr %s319, 4
          %s324 = smul.addr %s323, 64
          %s325 = scalar_lea.hbm %s3, %s324
          %s326 = sshll.u32 %s318, 4
          %s327 = int_to_ptr.vmem [resolvable:$true] %s326
          %332 = dma.hbm_to_vmem [thread:$0]  %s325, 4096, %s327, %s315, 256, 256, 16
        $region81: #{tpu_custom_call.1} parent=31 // pred_fallthru
          _
      $region32: #{tpu_custom_call.1} parent=5 // pred_fallthru
        _
      %p333 = scmp.le.s32.totalorder 1, %s18
      %p334 = scmp.lt.s32.totalorder %s18, 5
      %p335 = pnand %p333, %p334
      %p336 = pneg %p335
      // Predicated region
      $region82: #{tpu_custom_call.1} parent=5 // pred_check
        _
      $region83: #{tpu_custom_call.1} parent=5 // pred_check_branch
        %338 = sbr.rel (%p335) target = $region85
      $region84: #{tpu_custom_call.1} parent=5 // pred_region
        %s339 = ssub.s32 %s18, 1
        %s340 = sand.u32 %s52, 1
        %s341 = sand.u32 %s52, 1
        %s342 = smul.addr %s341, 8
        %s343 = scalar_lea.vmem [#allocation3], %s342
        // Predicated region
        $region86: #{tpu_custom_call.1} parent=84 // pred_check
          %p344 = pneg %p65
        $region87: #{tpu_custom_call.1} parent=84 // pred_check_branch
          %346 = sbr.rel (%p344) target = $region89
        $region88: #{tpu_custom_call.1} parent=84 // pred_region
          _
        $region89: #{tpu_custom_call.1} parent=84 // pred_fallthru
          _
        %s347 = sand.u32 %s104, 1
        %s348 = scalar_lea.sflag [#allocation5], %s347
        %s349 = sand.u32 %s104, 1
        %s350 = smul.addr %s349, 256
        %s351 = scalar_lea.vmem [#allocation4], %s350
        // Predicated region
        $region90: #{tpu_custom_call.1} parent=84 // pred_check
          %p352 = pneg %p117
        $region91: #{tpu_custom_call.1} parent=84 // pred_check_branch
          %354 = sbr.rel (%p352) target = $region93
        $region92: #{tpu_custom_call.1} parent=84 // pred_region
          %355 = dma.done %s348, 4096
        $region93: #{tpu_custom_call.1} parent=84 // pred_fallthru
          _
        %p356 = pneg %p39
        %p357 = pneg %p36
        %s358 = sand.u32 %s52, 1
        %s359 = sand.u32 %s52, 1
        %s360 = smul.addr %s359, 8
        %s361 = scalar_lea.vmem [#allocation3], %s360
        %p362 = pneg %p65
        %p363 = pneg %p62
        %p364 = scmp.lt.s32.totalorder %s23, 3
        %s365 = scalar_select %p364, %s23, 3
        %s366 = scalar_lea.vmem %s2, %s365
        %p367 = pneg %p91
        %p368 = pneg %p88
        %s369 = sand.u32 %s104, 1
        %s370 = scalar_lea.sflag [#allocation5], %s369
        %s371 = sand.u32 %s104, 1
        %s372 = smul.addr %s371, 256
        %s373 = scalar_lea.vmem [#allocation4], %s372
        %p374 = pneg %p117
        %p375 = pneg %p114
        %p376 = pneg %p138
        %p377 = pneg %p135
        %p378 = pneg %p159
        %p379 = pneg %p156
        %p380 = pneg %p180
        %p381 = pneg %p177
        %p382 = pneg %p201
        %p383 = pneg %p198
        %p384 = pneg %p222
        %p385 = pneg %p219
        %p386 = scmp.lt.s32.totalorder %s23, 3
        %s387 = scalar_select %p386, %s23, 3
        %s388 = scalar_lea.vmem %s2, %s387
        %s389 = smul.u32 16, %s23
        %p391 = scmp.eq.s32.totalorder %s23, 0
        // Predicated region
        $region94: #{tpu_custom_call.1} parent=84 // pred_check
          %p392 = pneg %p391
        $region95: #{tpu_custom_call.1} parent=84 // pred_check_branch
          %394 = sbr.rel (%p392) target = $region97
        $region96: #{tpu_custom_call.1} parent=84 // pred_region
          %395 = vst [vmem:[#allocation2] sm:$0xff] 0.0
          %396 = vst [vmem:[#allocation2 + $0x8] sm:$0xff] 0.0
          %397 = vst [vmem:[#allocation2 + $0x10] sm:$0xff] 0.0
          %398 = vst [vmem:[#allocation2 + $0x18] sm:$0xff] 0.0
        $region97: #{tpu_custom_call.1} parent=84 // pred_fallthru
          _
        %v399 = vld [vmem:[%s0] sm:$0xff]
        %v400 = vpack.c.bf16 %v399, %v399
        %v401 = vld [vmem:[%s343] sm:$0xf]
        %v402 = vld [vmem:[%s343 + $0x4] sm:$0xf]
        %v403 = vld [vmem:[%s388] sm:$0x1]
        %v405 = vlaneseq
        %v406 = vshrl.u32 %v405, 7
        %v407 = vsub.s32 0, %v406
        %v408 = vrot.slane %v403, %v407
        %v412 = vunpack.c.l.b16 %v401
        %v413 = vunpack.c.l.b16 %v402
        %v414 = vpack.c.b16 %v413, %v412
        %vm416 = vcmask 130048
        %v418 = vsel %vm416, %v400, 0
        %420 = vmatprep.subr.bf16.mxu0 0
        %421 = vmatpush1.bf16.msra.mxu0 %v414
        %422 = vmatprep.subr.bf16.mxu0 0
        %423 = vmatpush1.bf16.msra.mxu0 0
        %424 = vmatprep.subr.bf16.mxu0 0
        %425 = vmatpush1.bf16.msra.mxu0 0
        %426 = vmatprep.subr.bf16.mxu0 0
        %427 = vmatpush1.bf16.msra.mxu0 0
        %428 = vmatprep.subr.bf16.mxu0 0
        %429 = vmatpush1.bf16.msra.mxu0 0
        %430 = vmatprep.subr.bf16.mxu0 0
        %431 = vmatpush1.bf16.msra.mxu0 0
        %432 = vmatprep.subr.bf16.mxu0 0
        %433 = vmatpush1.bf16.msra.mxu0 0
        %434 = vmatprep.subr.bf16.mxu0 0
        %435 = vmatpush1.bf16.msra.mxu0 0
        %436 = vmatprep.subr.bf16.mxu0 0
        %437 = vmatpush1.bf16.msra.mxu0 0
        %438 = vmatprep.subr.bf16.mxu0 0
        %439 = vmatpush1.bf16.msra.mxu0 0
        %440 = vmatprep.subr.bf16.mxu0 0
        %441 = vmatpush1.bf16.msra.mxu0 0
        %442 = vmatprep.subr.bf16.mxu0 0
        %443 = vmatpush1.bf16.msra.mxu0 0
        %444 = vmatprep.subr.bf16.mxu0 0
        %445 = vmatpush1.bf16.msra.mxu0 0
        %446 = vmatprep.subr.bf16.mxu0 0
        %447 = vmatpush1.bf16.msra.mxu0 0
        %448 = vmatprep.subr.bf16.mxu0 0
        %449 = vmatpush1.bf16.msra.mxu0 0
        %450 = vmatprep.subr.bf16.mxu0 0
        %451 = vmatpush1.bf16.msra.mxu0 0
        %452 = vmatprep.mubr.bf16.mxu0 0
        %453 = vmatmul.mubr.bf16.gmra.mrb[0].mxu0 %v418
        %v454 = vpop.f32.mrb[0].mxu0
        %v455 = vadd.f32 %v408, %v454
        %v456 = vpop.f32.mrb[0].mxu0
        %v457 = vpop.f32.mrb[0].mxu0
        %v458 = vpop.f32.mrb[0].mxu0
        %459 = vdwg.mxu0
        %v460 = vmax.f32 %v455, 0.0
        %v461 = vld [vmem:[#allocation2] sm:$0xff]
        %v462 = vld [vmem:[#allocation2 + $0x8] sm:$0xff]
        %v463 = vld [vmem:[#allocation2 + $0x10] sm:$0xff]
        %v464 = vld [vmem:[#allocation2 + $0x18] sm:$0xff]
        %v465 = vpack.c.bf16 %v460, %v460
        %v466 = vld [vmem:[%s351] sm:$0xff]
        %v467 = vld [vmem:[%s351 + $0x8] sm:$0xff]
        %v468 = vld [vmem:[%s351 + $0x10] sm:$0xff]
        %v469 = vld [vmem:[%s351 + $0x18] sm:$0xff]
        %v470 = vld [vmem:[%s351 + $0x20] sm:$0xff]
        %v471 = vld [vmem:[%s351 + $0x28] sm:$0xff]
        %v472 = vld [vmem:[%s351 + $0x30] sm:$0xff]
        %v473 = vld [vmem:[%s351 + $0x38] sm:$0xff]
        %v474 = vld [vmem:[%s351 + $0x40] sm:$0xff]
        %v475 = vld [vmem:[%s351 + $0x48] sm:$0xff]
        %v476 = vld [vmem:[%s351 + $0x50] sm:$0xff]
        %v477 = vld [vmem:[%s351 + $0x58] sm:$0xff]
        %v478 = vld [vmem:[%s351 + $0x60] sm:$0xff]
        %v479 = vld [vmem:[%s351 + $0x68] sm:$0xff]
        %v480 = vld [vmem:[%s351 + $0x70] sm:$0xff]
        %v481 = vld [vmem:[%s351 + $0x78] sm:$0xff]
        %v482 = vld [vmem:[%s351 + $0x80] sm:$0xff]
        %v483 = vld [vmem:[%s351 + $0x88] sm:$0xff]
        %v484 = vld [vmem:[%s351 + $0x90] sm:$0xff]
        %v485 = vld [vmem:[%s351 + $0x98] sm:$0xff]
        %v486 = vld [vmem:[%s351 + $0xa0] sm:$0xff]
        %v487 = vld [vmem:[%s351 + $0xa8] sm:$0xff]
        %v488 = vld [vmem:[%s351 + $0xb0] sm:$0xff]
        %v489 = vld [vmem:[%s351 + $0xb8] sm:$0xff]
        %v490 = vld [vmem:[%s351 + $0xc0] sm:$0xff]
        %v491 = vld [vmem:[%s351 + $0xc8] sm:$0xff]
        %v492 = vld [vmem:[%s351 + $0xd0] sm:$0xff]
        %v493 = vld [vmem:[%s351 + $0xd8] sm:$0xff]
        %v494 = vld [vmem:[%s351 + $0xe0] sm:$0xff]
        %v495 = vld [vmem:[%s351 + $0xe8] sm:$0xff]
        %v496 = vld [vmem:[%s351 + $0xf0] sm:$0xff]
        %v497 = vld [vmem:[%s351 + $0xf8] sm:$0xff]
        %v530 = vunpack.c.l.b16 %v466
        %v531 = vunpack.c.h.b16 %v466
        %v532 = vunpack.c.l.b16 %v467
        %v533 = vunpack.c.h.b16 %v467
        %v534 = vunpack.c.l.b16 %v468
        %v535 = vunpack.c.h.b16 %v468
        %v536 = vunpack.c.l.b16 %v469
        %v537 = vunpack.c.h.b16 %v469
        %v538 = vunpack.c.l.b16 %v470
        %v539 = vunpack.c.h.b16 %v470
        %v540 = vunpack.c.l.b16 %v471
        %v541 = vunpack.c.h.b16 %v471
        %v542 = vunpack.c.l.b16 %v472
        %v543 = vunpack.c.h.b16 %v472
        %v544 = vunpack.c.l.b16 %v473
        %v545 = vunpack.c.h.b16 %v473
        %v546 = vunpack.c.l.b16 %v474
        %v547 = vunpack.c.h.b16 %v474
        %v548 = vunpack.c.l.b16 %v475
        %v549 = vunpack.c.h.b16 %v475
        %v550 = vunpack.c.l.b16 %v476
        %v551 = vunpack.c.h.b16 %v476
        %v552 = vunpack.c.l.b16 %v477
        %v553 = vunpack.c.h.b16 %v477
        %v554 = vunpack.c.l.b16 %v478
        %v555 = vunpack.c.h.b16 %v478
        %v556 = vunpack.c.l.b16 %v479
        %v557 = vunpack.c.h.b16 %v479
        %v558 = vunpack.c.l.b16 %v480
        %v559 = vunpack.c.h.b16 %v480
        %v560 = vunpack.c.l.b16 %v481
        %v561 = vunpack.c.h.b16 %v481
        %v562 = vunpack.c.l.b16 %v482
        %v563 = vunpack.c.h.b16 %v482
        %v564 = vunpack.c.l.b16 %v483
        %v565 = vunpack.c.h.b16 %v483
        %v566 = vunpack.c.l.b16 %v484
        %v567 = vunpack.c.h.b16 %v484
        %v568 = vunpack.c.l.b16 %v485
        %v569 = vunpack.c.h.b16 %v485
        %v570 = vunpack.c.l.b16 %v486
        %v571 = vunpack.c.h.b16 %v486
        %v572 = vunpack.c.l.b16 %v487
        %v573 = vunpack.c.h.b16 %v487
        %v574 = vunpack.c.l.b16 %v488
        %v575 = vunpack.c.h.b16 %v488
        %v576 = vunpack.c.l.b16 %v489
        %v577 = vunpack.c.h.b16 %v489
        %v578 = vunpack.c.l.b16 %v490
        %v579 = vunpack.c.h.b16 %v490
        %v580 = vunpack.c.l.b16 %v491
        %v581 = vunpack.c.h.b16 %v491
        %v582 = vunpack.c.l.b16 %v492
        %v583 = vunpack.c.h.b16 %v492
        %v584 = vunpack.c.l.b16 %v493
        %v585 = vunpack.c.h.b16 %v493
        %v586 = vunpack.c.l.b16 %v494
        %v587 = vunpack.c.h.b16 %v494
        %v588 = vunpack.c.l.b16 %v495
        %v589 = vunpack.c.h.b16 %v495
        %v590 = vunpack.c.l.b16 %v496
        %v591 = vunpack.c.h.b16 %v496
        %v592 = vunpack.c.l.b16 %v497
        %v593 = vunpack.c.h.b16 %v497
        %v594 = vpack.c.b16 %v534, %v530
        %v595 = vpack.c.b16 %v535, %v531
        %v596 = vpack.c.b16 %v536, %v532
        %v597 = vpack.c.b16 %v537, %v533
        %v598 = vpack.c.b16 %v542, %v538
        %v599 = vpack.c.b16 %v543, %v539
        %v600 = vpack.c.b16 %v544, %v540
        %v601 = vpack.c.b16 %v545, %v541
        %v602 = vpack.c.b16 %v550, %v546
        %v603 = vpack.c.b16 %v551, %v547
        %v604 = vpack.c.b16 %v552, %v548
        %v605 = vpack.c.b16 %v553, %v549
        %v606 = vpack.c.b16 %v558, %v554
        %v607 = vpack.c.b16 %v559, %v555
        %v608 = vpack.c.b16 %v560, %v556
        %v609 = vpack.c.b16 %v561, %v557
        %v610 = vpack.c.b16 %v566, %v562
        %v611 = vpack.c.b16 %v567, %v563
        %v612 = vpack.c.b16 %v568, %v564
        %v613 = vpack.c.b16 %v569, %v565
        %v614 = vpack.c.b16 %v574, %v570
        %v615 = vpack.c.b16 %v575, %v571
        %v616 = vpack.c.b16 %v576, %v572
        %v617 = vpack.c.b16 %v577, %v573
        %v618 = vpack.c.b16 %v582, %v578
        %v619 = vpack.c.b16 %v583, %v579
        %v620 = vpack.c.b16 %v584, %v580
        %v621 = vpack.c.b16 %v585, %v581
        %v622 = vpack.c.b16 %v590, %v586
        %v623 = vpack.c.b16 %v591, %v587
        %v624 = vpack.c.b16 %v592, %v588
        %v625 = vpack.c.b16 %v593, %v589
        %658 = vmatprep.subr.bf16.mxu0 %v595
        %659 = vmatpush1.bf16.msra.mxu0 %v594
        %660 = vmatprep.subr.bf16.mxu0 %v599
        %661 = vmatpush1.bf16.msra.mxu0 %v598
        %662 = vmatprep.subr.bf16.mxu0 %v603
        %663 = vmatpush1.bf16.msra.mxu0 %v602
        %664 = vmatprep.subr.bf16.mxu0 %v607
        %665 = vmatpush1.bf16.msra.mxu0 %v606
        %666 = vmatprep.subr.bf16.mxu0 %v611
        %667 = vmatpush1.bf16.msra.mxu0 %v610
        %668 = vmatprep.subr.bf16.mxu0 %v615
        %669 = vmatpush1.bf16.msra.mxu0 %v614
        %670 = vmatprep.subr.bf16.mxu0 %v619
        %671 = vmatpush1.bf16.msra.mxu0 %v618
        %672 = vmatprep.subr.bf16.mxu0 %v623
        %673 = vmatpush1.bf16.msra.mxu0 %v622
        %674 = vmatprep.subr.bf16.mxu0 0
        %675 = vmatpush1.bf16.msra.mxu0 0
        %676 = vmatprep.subr.bf16.mxu0 0
        %677 = vmatpush1.bf16.msra.mxu0 0
        %678 = vmatprep.subr.bf16.mxu0 0
        %679 = vmatpush1.bf16.msra.mxu0 0
        %680 = vmatprep.subr.bf16.mxu0 0
        %681 = vmatpush1.bf16.msra.mxu0 0
        %682 = vmatprep.subr.bf16.mxu0 0
        %683 = vmatpush1.bf16.msra.mxu0 0
        %684 = vmatprep.subr.bf16.mxu0 0
        %685 = vmatpush1.bf16.msra.mxu0 0
        %686 = vmatprep.subr.bf16.mxu0 0
        %687 = vmatpush1.bf16.msra.mxu0 0
        %688 = vmatprep.subr.bf16.mxu0 0
        %689 = vmatpush1.bf16.msra.mxu0 0
        %690 = vmatprep.mubr.bf16.mxu0 0
        %691 = vmatmul.mubr.bf16.gmra.mrb[0].mxu0 %v465
        %v692 = vpop.f32.mrb[0].mxu0
        %v693 = vadd.f32 0.0, %v692
        %v694 = vpop.f32.mrb[0].mxu0
        %v695 = vadd.f32 0.0, %v694
        %v696 = vpop.f32.mrb[0].mxu0
        %v697 = vpop.f32.mrb[0].mxu0
        %698 = vdwg.mxu0
        %699 = vmatprep.subr.bf16.mxu0 %v597
        %700 = vmatpush1.bf16.msra.mxu0 %v596
        %701 = vmatprep.subr.bf16.mxu0 %v601
        %702 = vmatpush1.bf16.msra.mxu0 %v600
        %703 = vmatprep.subr.bf16.mxu0 %v605
        %704 = vmatpush1.bf16.msra.mxu0 %v604
        %705 = vmatprep.subr.bf16.mxu0 %v609
        %706 = vmatpush1.bf16.msra.mxu0 %v608
        %707 = vmatprep.subr.bf16.mxu0 %v613
        %708 = vmatpush1.bf16.msra.mxu0 %v612
        %709 = vmatprep.subr.bf16.mxu0 %v617
        %710 = vmatpush1.bf16.msra.mxu0 %v616
        %711 = vmatprep.subr.bf16.mxu0 %v621
        %712 = vmatpush1.bf16.msra.mxu0 %v620
        %713 = vmatprep.subr.bf16.mxu0 %v625
        %714 = vmatpush1.bf16.msra.mxu0 %v624
        %715 = vmatprep.subr.bf16.mxu0 0
        %716 = vmatpush1.bf16.msra.mxu0 0
        %717 = vmatprep.subr.bf16.mxu0 0
        %718 = vmatpush1.bf16.msra.mxu0 0
        %719 = vmatprep.subr.bf16.mxu0 0
        %720 = vmatpush1.bf16.msra.mxu0 0
        %721 = vmatprep.subr.bf16.mxu0 0
        %722 = vmatpush1.bf16.msra.mxu0 0
        %723 = vmatprep.subr.bf16.mxu0 0
        %724 = vmatpush1.bf16.msra.mxu0 0
        %725 = vmatprep.subr.bf16.mxu0 0
        %726 = vmatpush1.bf16.msra.mxu0 0
        %727 = vmatprep.subr.bf16.mxu0 0
        %728 = vmatpush1.bf16.msra.mxu0 0
        %729 = vmatprep.subr.bf16.mxu0 0
        %730 = vmatpush1.bf16.msra.mxu0 0
        %731 = vmatprep.mubr.bf16.mxu0 0
        %732 = vmatmul.mubr.bf16.gmra.mrb[0].mxu0 %v465
        %v733 = vpop.f32.mrb[0].mxu0
        %v734 = vadd.f32 0.0, %v733
        %v735 = vpop.f32.mrb[0].mxu0
        %v736 = vadd.f32 0.0, %v735
        %v737 = vpop.f32.mrb[0].mxu0
        %v738 = vpop.f32.mrb[0].mxu0
        %739 = vdwg.mxu0
        %v740 = vadd.f32 %v461, %v693
        %v741 = vadd.f32 %v462, %v695
        %v742 = vadd.f32 %v463, %v734
        %v743 = vadd.f32 %v464, %v736
        %744 = vst [vmem:[#allocation2] sm:$0xff] %v740
        %745 = vst [vmem:[#allocation2 + $0x8] sm:$0xff] %v741
        %746 = vst [vmem:[#allocation2 + $0x10] sm:$0xff] %v742
        %747 = vst [vmem:[#allocation2 + $0x18] sm:$0xff] %v743
        %p748 = scmp.eq.s32.totalorder %s23, 3
        // Predicated region
        $region98: #{tpu_custom_call.1} parent=84 // pred_check
          %p749 = pneg %p748
        $region99: #{tpu_custom_call.1} parent=84 // pred_check_branch
          %751 = sbr.rel (%p749) target = $region101
        $region100: #{tpu_custom_call.1} parent=84 // pred_region
          %v752 = vld [vmem:[#allocation2] sm:$0xff]
          %v753 = vld [vmem:[#allocation2 + $0x8] sm:$0xff]
          %v754 = vld [vmem:[#allocation2 + $0x10] sm:$0xff]
          %v755 = vld [vmem:[#allocation2 + $0x18] sm:$0xff]
          %v756 = vld [vmem:[%s5] sm:$0xf]
          %v758 = vlaneseq
          %v759 = vshrl.u32 %v758, 7
          %v760 = vsub.s32 0, %v759
          %v761 = vrot.slane %v756, %v760
          %v762 = vlaneseq
          %v763 = vshrl.u32 %v762, 7
          %v764 = vsub.s32 1, %v763
          %v765 = vrot.slane %v756, %v764
          %v766 = vlaneseq
          %v767 = vshrl.u32 %v766, 7
          %v768 = vsub.s32 2, %v767
          %v769 = vrot.slane %v756, %v768
          %v770 = vlaneseq
          %v771 = vshrl.u32 %v770, 7
          %v772 = vsub.s32 3, %v771
          %v773 = vrot.slane %v756, %v772
          %v778 = vadd.f32 %v752, %v761
          %v779 = vadd.f32 %v753, %v765
          %v780 = vadd.f32 %v754, %v769
          %v781 = vadd.f32 %v755, %v773
          %v782 = vmax.f32 %v778, 0.0
          %v783 = vmax.f32 %v779, 0.0
          %v784 = vmax.f32 %v780, 0.0
          %v785 = vmax.f32 %v781, 0.0
          %v786 = vpack.c.bf16 %v782, %v782
          %v787 = vpack.c.bf16 %v783, %v783
          %v788 = vpack.c.bf16 %v784, %v784
          %v789 = vpack.c.bf16 %v785, %v785
          %v790 = vld [vmem:[%s4] sm:$0xf]
          %v791 = vld [vmem:[%s4 + $0x4] sm:$0xf]
          %v792 = vld [vmem:[%s4 + $0x8] sm:$0xf]
          %v793 = vld [vmem:[%s4 + $0xc] sm:$0xf]
          %v794 = vld [vmem:[%s4 + $0x10] sm:$0xf]
          %v795 = vld [vmem:[%s4 + $0x14] sm:$0xf]
          %v796 = vld [vmem:[%s4 + $0x18] sm:$0xf]
          %v797 = vld [vmem:[%s4 + $0x1c] sm:$0xf]
          %v798 = vld [vmem:[%s4 + $0x20] sm:$0xf]
          %v799 = vld [vmem:[%s4 + $0x24] sm:$0xf]
          %v800 = vld [vmem:[%s4 + $0x28] sm:$0xf]
          %v801 = vld [vmem:[%s4 + $0x2c] sm:$0xf]
          %v802 = vld [vmem:[%s4 + $0x30] sm:$0xf]
          %v803 = vld [vmem:[%s4 + $0x34] sm:$0xf]
          %v804 = vld [vmem:[%s4 + $0x38] sm:$0xf]
          %v805 = vld [vmem:[%s4 + $0x3c] sm:$0xf]
          %v806 = vld [vmem:[%s4 + $0x40] sm:$0xf]
          %v807 = vld [vmem:[%s4 + $0x44] sm:$0xf]
          %v808 = vld [vmem:[%s4 + $0x48] sm:$0xf]
          %v809 = vld [vmem:[%s4 + $0x4c] sm:$0xf]
          %v810 = vld [vmem:[%s4 + $0x50] sm:$0xf]
          %v811 = vld [vmem:[%s4 + $0x54] sm:$0xf]
          %v812 = vld [vmem:[%s4 + $0x58] sm:$0xf]
          %v813 = vld [vmem:[%s4 + $0x5c] sm:$0xf]
          %v814 = vld [vmem:[%s4 + $0x60] sm:$0xf]
          %v815 = vld [vmem:[%s4 + $0x64] sm:$0xf]
          %v816 = vld [vmem:[%s4 + $0x68] sm:$0xf]
          %v817 = vld [vmem:[%s4 + $0x6c] sm:$0xf]
          %v818 = vld [vmem:[%s4 + $0x70] sm:$0xf]
          %v819 = vld [vmem:[%s4 + $0x74] sm:$0xf]
          %v820 = vld [vmem:[%s4 + $0x78] sm:$0xf]
          %v821 = vld [vmem:[%s4 + $0x7c] sm:$0xf]
          %v822 = vld [vmem:[%s4 + $0x80] sm:$0xf]
          %v823 = vld [vmem:[%s4 + $0x84] sm:$0xf]
          %v824 = vld [vmem:[%s4 + $0x88] sm:$0xf]
          %v825 = vld [vmem:[%s4 + $0x8c] sm:$0xf]
          %v826 = vld [vmem:[%s4 + $0x90] sm:$0xf]
          %v827 = vld [vmem:[%s4 + $0x94] sm:$0xf]
          %v828 = vld [vmem:[%s4 + $0x98] sm:$0xf]
          %v829 = vld [vmem:[%s4 + $0x9c] sm:$0xf]
          %v830 = vld [vmem:[%s4 + $0xa0] sm:$0xf]
          %v831 = vld [vmem:[%s4 + $0xa4] sm:$0xf]
          %v832 = vld [vmem:[%s4 + $0xa8] sm:$0xf]
          %v833 = vld [vmem:[%s4 + $0xac] sm:$0xf]
          %v834 = vld [vmem:[%s4 + $0xb0] sm:$0xf]
          %v835 = vld [vmem:[%s4 + $0xb4] sm:$0xf]
          %v836 = vld [vmem:[%s4 + $0xb8] sm:$0xf]
          %v837 = vld [vmem:[%s4 + $0xbc] sm:$0xf]
          %v838 = vld [vmem:[%s4 + $0xc0] sm:$0xf]
          %v839 = vld [vmem:[%s4 + $0xc4] sm:$0xf]
          %v840 = vld [vmem:[%s4 + $0xc8] sm:$0xf]
          %v841 = vld [vmem:[%s4 + $0xcc] sm:$0xf]
          %v842 = vld [vmem:[%s4 + $0xd0] sm:$0xf]
          %v843 = vld [vmem:[%s4 + $0xd4] sm:$0xf]
          %v844 = vld [vmem:[%s4 + $0xd8] sm:$0xf]
          %v845 = vld [vmem:[%s4 + $0xdc] sm:$0xf]
          %v846 = vld [vmem:[%s4 + $0xe0] sm:$0xf]
          %v847 = vld [vmem:[%s4 + $0xe4] sm:$0xf]
          %v848 = vld [vmem:[%s4 + $0xe8] sm:$0xf]
          %v849 = vld [vmem:[%s4 + $0xec] sm:$0xf]
          %v850 = vld [vmem:[%s4 + $0xf0] sm:$0xf]
          %v851 = vld [vmem:[%s4 + $0xf4] sm:$0xf]
          %v852 = vld [vmem:[%s4 + $0xf8] sm:$0xf]
          %v853 = vld [vmem:[%s4 + $0xfc] sm:$0xf]
          %v854 = vld [vmem:[%s5 + $0x4] sm:$0x1]
          %v856 = vlaneseq
          %v857 = vshrl.u32 %v856, 7
          %v858 = vsub.s32 0, %v857
          %v859 = vrot.slane %v854, %v858
          %v925 = vunpack.c.l.b16 %v790
          %v926 = vunpack.c.l.b16 %v791
          %v927 = vunpack.c.l.b16 %v792
          %v928 = vunpack.c.l.b16 %v793
          %v929 = vunpack.c.l.b16 %v794
          %v930 = vunpack.c.l.b16 %v795
          %v931 = vunpack.c.l.b16 %v796
          %v932 = vunpack.c.l.b16 %v797
          %v933 = vunpack.c.l.b16 %v798
          %v934 = vunpack.c.l.b16 %v799
          %v935 = vunpack.c.l.b16 %v800
          %v936 = vunpack.c.l.b16 %v801
          %v937 = vunpack.c.l.b16 %v802
          %v938 = vunpack.c.l.b16 %v803
          %v939 = vunpack.c.l.b16 %v804
          %v940 = vunpack.c.l.b16 %v805
          %v941 = vunpack.c.l.b16 %v806
          %v942 = vunpack.c.l.b16 %v807
          %v943 = vunpack.c.l.b16 %v808
          %v944 = vunpack.c.l.b16 %v809
          %v945 = vunpack.c.l.b16 %v810
          %v946 = vunpack.c.l.b16 %v811
          %v947 = vunpack.c.l.b16 %v812
          %v948 = vunpack.c.l.b16 %v813
          %v949 = vunpack.c.l.b16 %v814
          %v950 = vunpack.c.l.b16 %v815
          %v951 = vunpack.c.l.b16 %v816
          %v952 = vunpack.c.l.b16 %v817
          %v953 = vunpack.c.l.b16 %v818
          %v954 = vunpack.c.l.b16 %v819
          %v955 = vunpack.c.l.b16 %v820
          %v956 = vunpack.c.l.b16 %v821
          %v957 = vunpack.c.l.b16 %v822
          %v958 = vunpack.c.l.b16 %v823
          %v959 = vunpack.c.l.b16 %v824
          %v960 = vunpack.c.l.b16 %v825
          %v961 = vunpack.c.l.b16 %v826
          %v962 = vunpack.c.l.b16 %v827
          %v963 = vunpack.c.l.b16 %v828
          %v964 = vunpack.c.l.b16 %v829
          %v965 = vunpack.c.l.b16 %v830
          %v966 = vunpack.c.l.b16 %v831
          %v967 = vunpack.c.l.b16 %v832
          %v968 = vunpack.c.l.b16 %v833
          %v969 = vunpack.c.l.b16 %v834
          %v970 = vunpack.c.l.b16 %v835
          %v971 = vunpack.c.l.b16 %v836
          %v972 = vunpack.c.l.b16 %v837
          %v973 = vunpack.c.l.b16 %v838
          %v974 = vunpack.c.l.b16 %v839
          %v975 = vunpack.c.l.b16 %v840
          %v976 = vunpack.c.l.b16 %v841
          %v977 = vunpack.c.l.b16 %v842
          %v978 = vunpack.c.l.b16 %v843
          %v979 = vunpack.c.l.b16 %v844
          %v980 = vunpack.c.l.b16 %v845
          %v981 = vunpack.c.l.b16 %v846
          %v982 = vunpack.c.l.b16 %v847
          %v983 = vunpack.c.l.b16 %v848
          %v984 = vunpack.c.l.b16 %v849
          %v985 = vunpack.c.l.b16 %v850
          %v986 = vunpack.c.l.b16 %v851
          %v987 = vunpack.c.l.b16 %v852
          %v988 = vunpack.c.l.b16 %v853
          %v989 = vpack.c.b16 %v926, %v925
          %v990 = vpack.c.b16 %v928, %v927
          %v991 = vpack.c.b16 %v930, %v929
          %v992 = vpack.c.b16 %v932, %v931
          %v993 = vpack.c.b16 %v934, %v933
          %v994 = vpack.c.b16 %v936, %v935
          %v995 = vpack.c.b16 %v938, %v937
          %v996 = vpack.c.b16 %v940, %v939
          %v997 = vpack.c.b16 %v942, %v941
          %v998 = vpack.c.b16 %v944, %v943
          %v999 = vpack.c.b16 %v946, %v945
          %v1000 = vpack.c.b16 %v948, %v947
          %v1001 = vpack.c.b16 %v950, %v949
          %v1002 = vpack.c.b16 %v952, %v951
          %v1003 = vpack.c.b16 %v954, %v953
          %v1004 = vpack.c.b16 %v956, %v955
          %v1005 = vpack.c.b16 %v958, %v957
          %v1006 = vpack.c.b16 %v960, %v959
          %v1007 = vpack.c.b16 %v962, %v961
          %v1008 = vpack.c.b16 %v964, %v963
          %v1009 = vpack.c.b16 %v966, %v965
          %v1010 = vpack.c.b16 %v968, %v967
          %v1011 = vpack.c.b16 %v970, %v969
          %v1012 = vpack.c.b16 %v972, %v971
          %v1013 = vpack.c.b16 %v974, %v973
          %v1014 = vpack.c.b16 %v976, %v975
          %v1015 = vpack.c.b16 %v978, %v977
          %v1016 = vpack.c.b16 %v980, %v979
          %v1017 = vpack.c.b16 %v982, %v981
          %v1018 = vpack.c.b16 %v984, %v983
          %v1019 = vpack.c.b16 %v986, %v985
          %v1020 = vpack.c.b16 %v988, %v987
          %1053 = vmatprep.subr.bf16.mxu0 0
          %1054 = vmatpush1.bf16.msra.mxu0 %v989
          %1055 = vmatprep.subr.bf16.mxu0 0
          %1056 = vmatpush1.bf16.msra.mxu0 %v990
          %1057 = vmatprep.subr.bf16.mxu0 0
          %1058 = vmatpush1.bf16.msra.mxu0 %v991
          %1059 = vmatprep.subr.bf16.mxu0 0
          %1060 = vmatpush1.bf16.msra.mxu0 %v992
          %1061 = vmatprep.subr.bf16.mxu0 0
          %1062 = vmatpush1.bf16.msra.mxu0 %v993
          %1063 = vmatprep.subr.bf16.mxu0 0
          %1064 = vmatpush1.bf16.msra.mxu0 %v994
          %1065 = vmatprep.subr.bf16.mxu0 0
          %1066 = vmatpush1.bf16.msra.mxu0 %v995
          %1067 = vmatprep.subr.bf16.mxu0 0
          %1068 = vmatpush1.bf16.msra.mxu0 %v996
          %1069 = vmatprep.subr.bf16.mxu0 0
          %1070 = vmatpush1.bf16.msra.mxu0 %v997
          %1071 = vmatprep.subr.bf16.mxu0 0
          %1072 = vmatpush1.bf16.msra.mxu0 %v998
          %1073 = vmatprep.subr.bf16.mxu0 0
          %1074 = vmatpush1.bf16.msra.mxu0 %v999
          %1075 = vmatprep.subr.bf16.mxu0 0
          %1076 = vmatpush1.bf16.msra.mxu0 %v1000
          %1077 = vmatprep.subr.bf16.mxu0 0
          %1078 = vmatpush1.bf16.msra.mxu0 %v1001
          %1079 = vmatprep.subr.bf16.mxu0 0
          %1080 = vmatpush1.bf16.msra.mxu0 %v1002
          %1081 = vmatprep.subr.bf16.mxu0 0
          %1082 = vmatpush1.bf16.msra.mxu0 %v1003
          %1083 = vmatprep.subr.bf16.mxu0 0
          %1084 = vmatpush1.bf16.msra.mxu0 %v1004
          %1085 = vmatprep.mubr.bf16.mxu0 %v787
          %1086 = vmatmul.mubr.bf16.gmra.mrb[0].mxu0 %v786
          %v1087 = vpop.f32.mrb[0].mxu0
          %v1088 = vadd.f32 %v859, %v1087
          %v1089 = vpop.f32.mrb[0].mxu0
          %v1090 = vpop.f32.mrb[0].mxu0
          %v1091 = vpop.f32.mrb[0].mxu0
          %1092 = vdwg.mxu0
          %1093 = vmatprep.subr.bf16.mxu0 0
          %1094 = vmatpush1.bf16.msra.mxu0 %v1005
          %1095 = vmatprep.subr.bf16.mxu0 0
          %1096 = vmatpush1.bf16.msra.mxu0 %v1006
          %1097 = vmatprep.subr.bf16.mxu0 0
          %1098 = vmatpush1.bf16.msra.mxu0 %v1007
          %1099 = vmatprep.subr.bf16.mxu0 0
          %1100 = vmatpush1.bf16.msra.mxu0 %v1008
          %1101 = vmatprep.subr.bf16.mxu0 0
          %1102 = vmatpush1.bf16.msra.mxu0 %v1009
          %1103 = vmatprep.subr.bf16.mxu0 0
          %1104 = vmatpush1.bf16.msra.mxu0 %v1010
          %1105 = vmatprep.subr.bf16.mxu0 0
          %1106 = vmatpush1.bf16.msra.mxu0 %v1011
          %1107 = vmatprep.subr.bf16.mxu0 0
          %1108 = vmatpush1.bf16.msra.mxu0 %v1012
          %1109 = vmatprep.subr.bf16.mxu0 0
          %1110 = vmatpush1.bf16.msra.mxu0 %v1013
          %1111 = vmatprep.subr.bf16.mxu0 0
          %1112 = vmatpush1.bf16.msra.mxu0 %v1014
          %1113 = vmatprep.subr.bf16.mxu0 0
          %1114 = vmatpush1.bf16.msra.mxu0 %v1015
          %1115 = vmatprep.subr.bf16.mxu0 0
          %1116 = vmatpush1.bf16.msra.mxu0 %v1016
          %1117 = vmatprep.subr.bf16.mxu0 0
          %1118 = vmatpush1.bf16.msra.mxu0 %v1017
          %1119 = vmatprep.subr.bf16.mxu0 0
          %1120 = vmatpush1.bf16.msra.mxu0 %v1018
          %1121 = vmatprep.subr.bf16.mxu0 0
          %1122 = vmatpush1.bf16.msra.mxu0 %v1019
          %1123 = vmatprep.subr.bf16.mxu0 0
          %1124 = vmatpush1.bf16.msra.mxu0 %v1020
          %1125 = vmatprep.mubr.bf16.mxu0 %v789
          %1126 = vmatmul.mubr.bf16.gmra.mrb[0].mxu0 %v788
          %v1127 = vpop.f32.mrb[0].mxu0
          %v1128 = vadd.f32 %v1088, %v1127
          %v1129 = vpop.f32.mrb[0].mxu0
          %v1130 = vpop.f32.mrb[0].mxu0
          %v1131 = vpop.f32.mrb[0].mxu0
          %1132 = vdwg.mxu0
          %v1133 = vtanh.pop %v1128
          %v1134 = vld [vmem:[%s6] sm:$0xff]
          %v1135 = vadd.f32 %v1133, %v1134
          %v1136 = vtanh.pop %v1135
          %v1137 = vlaneseq
          %v1138 = vand.u32 %v1137, 127
          %vm1139 = vcmp.eq.s32.totalorder %v1138, 1
          %v1140 = vsel %vm1139, 2.84, 0.22
          %v1141 = vsel %vm1139, 5.68, 0.44
          %v1142 = vmul.f32 %v1136, %v1140
          %v1143 = vadd.f32 %v1142, 0.0
          %vm1144 = vcmask 15360
          %1145 = vst.msk [vmem:[%s7] sm:$0xff] %vm1144, %v1143
          %v1146 = vmul.f32 %v1134, -0.5
          %v1147 = vmul.f32 %v1146, %v1134
          %v1148 = vsub.f32 %v1147, 0.9189385
          %v1149 = vmul.f32 %v1136, %v1136
          %v1150 = vsub.f32 1.0, %v1149
          %v1151 = vmul.f32 %v1141, %v1150
          %v1152 = vadd.f32 %v1151, 1e-06
          %v1153 = vlog2.pop %v1152
          %v1154 = vmul.f32 %v1153, 0.6931472
          %v1155 = vsub.f32 %v1148, %v1154
          %v1156 = vsel %vm1144, %v1155, 0.0
          %1157 = vadd.xlane.f32.xlu0 %v1156
          %v1158 = vpop.xlane.xlu0 %1157
          %vm1159 = vcmask 7168
          %1160 = vst.msk [vmem:[%s8] sm:$0xff] %vm1159, %v1158
        $region101: #{tpu_custom_call.1} parent=84 // pred_fallthru
          _
        // Predicated region
        $region102: #{tpu_custom_call.1} parent=84 // pred_check
          %p1161 = pneg %p198
        $region103: #{tpu_custom_call.1} parent=84 // pred_check_branch
          %1163 = sbr.rel (%p1161) target = $region105
        $region104: #{tpu_custom_call.1} parent=84 // pred_region
          _
        $region105: #{tpu_custom_call.1} parent=84 // pred_fallthru
          _
        // Predicated region
        $region106: #{tpu_custom_call.1} parent=84 // pred_check
          %p1164 = pneg %p219
        $region107: #{tpu_custom_call.1} parent=84 // pred_check_branch
          %1166 = sbr.rel (%p1164) target = $region109
        $region108: #{tpu_custom_call.1} parent=84 // pred_region
          _
        $region109: #{tpu_custom_call.1} parent=84 // pred_fallthru
          _
        // Predicated region
        $region110: #{tpu_custom_call.1} parent=84 // pred_check
          %p1167 = pneg %p198
        $region111: #{tpu_custom_call.1} parent=84 // pred_check_branch
          %1169 = sbr.rel (%p1167) target = $region113
        $region112: #{tpu_custom_call.1} parent=84 // pred_region
          _
        $region113: #{tpu_custom_call.1} parent=84 // pred_fallthru
          _
        // Predicated region
        $region114: #{tpu_custom_call.1} parent=84 // pred_check
          %p1170 = pneg %p219
        $region115: #{tpu_custom_call.1} parent=84 // pred_check_branch
          %1172 = sbr.rel (%p1170) target = $region117
        $region116: #{tpu_custom_call.1} parent=84 // pred_region
          _
        $region117: #{tpu_custom_call.1} parent=84 // pred_fallthru
          _
      $region85: #{tpu_custom_call.1} parent=5 // pred_fallthru
        _
      %p1173 = scmp.le.s32.totalorder 2, %s18
      // Predicated region
      $region118: #{tpu_custom_call.1} parent=5 // pred_check
        %p1174 = pneg %p1173
      $region119: #{tpu_custom_call.1} parent=5 // pred_check_branch
        %1176 = sbr.rel (%p1174) target = $region121
      $region120: #{tpu_custom_call.1} parent=5 // pred_region
        %s1177 = ssub.s32 %s18, 2
      $region121: #{tpu_custom_call.1} parent=5 // pred_fallthru
        _
    $region6: #{tpu_custom_call.1} parent=1 // loop_footer
      %s22 = sadd.s32 1, %s18
    $region7: #{tpu_custom_call.1} parent=1 // loop_footer_branch
      %17 = sbr.rel target = $region3
    $region8: #{tpu_custom_call.1} parent=1 // loop_exit
      _
    %1178 = vsyncpa [#allocation5], 1
    %s1179 = scalar_lea.sflag [#allocation5], 1
    %1180 = vsyncpa %s1179, 1

</llo_original>
